<compile_context>
chip_gen: v7x
topology: tpu7x:2x2x1
jax: 0.10.0
libtpu: 0.0.40
codegen_flags: <defaults>
</compile_context>

<pallas_src>
import functools

import jax
import jax.numpy as jnp
from jax.experimental import pallas as pl
from jax.experimental.pallas import tpu as pltpu

IN_DIM = 4
HIDDEN = 64
OUT_DIM = 2


def _round_up(x, m):
    return ((x + m - 1) // m) * m


def critic_kernel(x_ref, w1_ref, b1_ref, w2_ref, b2_ref, w3_ref, b3_ref, o_ref):
    # Hot path: three small matmuls + two ReLUs, fused in VMEM, f32 accumulation.
    x = x_ref[...].astype(jnp.float32)

    h1 = jnp.dot(x, w1_ref[...], preferred_element_type=jnp.float32) + b1_ref[...]
    h1 = jnp.maximum(h1, 0.0)

    h2 = jnp.dot(h1, w2_ref[...], preferred_element_type=jnp.float32) + b2_ref[...]
    h2 = jnp.maximum(h2, 0.0)

    out = jnp.dot(h2, w3_ref[...], preferred_element_type=jnp.float32) + b3_ref[...]
    o_ref[...] = out.astype(o_ref.dtype)


@functools.partial(jax.jit, static_argnames=("tile_b", "cast_state_bf16"))
def critic_forward(state, params, tile_b=None, cast_state_bf16=False):
    """state: [B, 4] float32. params from init_params(). Returns [B, 2] f32."""
    w1, b1, w2, b2, w3, b3 = params
    B = state.shape[0]

    if tile_b is None:
        # Large tiles to amortize the ~0.35 us per-grid-step overhead, but keep
        # >= 2 grid steps when the batch allows so v7x's two TensorCores both
        # get work via the "parallel" batch axis. Multiple of 256 keeps the MXU
        # M-side full and rows (8,*)-aligned.
        b_aligned = _round_up(max(B, 1), 256)
        tile_b = max(256, min(4096, _round_up(pl.cdiv(b_aligned, 2), 256)))
    b_pad = _round_up(B, tile_b)
    if b_pad != B:
        state = jnp.pad(state, ((0, b_pad - B), (0, 0)))

    if cast_state_bf16:
        # Halves the dominant HBM input stream (biggest relative win on v5e);
        # kernel re-ups to f32 and accumulates in f32.
        state = state.astype(jnp.bfloat16)

    grid = (b_pad // tile_b,)

    # Weights/biases: full-array blocks with constant index_map -> loaded once,
    # VMEM-resident across all grid steps.
    resident = lambda a: pl.BlockSpec(a.shape, lambda i: (0,) * a.ndim)

    weight_bytes = sum(int(a.size) * a.dtype.itemsize for a in params)
    cost = pl.CostEstimate(
        flops=2 * b_pad * (IN_DIM * HIDDEN + HIDDEN * HIDDEN + HIDDEN * OUT_DIM),
        transcendentals=0,
        bytes_accessed=b_pad * IN_DIM * state.dtype.itemsize
        + b_pad * OUT_DIM * 4
        + weight_bytes,
    )

    out = pl.pallas_call(
        critic_kernel,
        out_shape=jax.ShapeDtypeStruct((b_pad, OUT_DIM), jnp.float32),
        grid_spec=pltpu.PrefetchScalarGridSpec(
            num_scalar_prefetch=0,
            grid=grid,
            in_specs=[
                pl.BlockSpec((tile_b, IN_DIM), lambda i: (i, 0)),  # state tile
                resident(w1), resident(b1),
                resident(w2), resident(b2),
                resident(w3), resident(b3),
            ],
            out_specs=pl.BlockSpec((tile_b, OUT_DIM), lambda i: (i, 0)),
        ),
        compiler_params=pltpu.CompilerParams(
            dimension_semantics=("parallel",),  # megacore-shard batch on v7x
            vmem_limit_bytes=32 << 20,          # headroom for large tiles
        ),
        cost_estimate=cost,
    )(state, w1, b1, w2, b2, w3, b3)

    # Only padded batch rows need dropping; no column padding anymore.
    return out[:B]


def init_params(key):
    """Deterministic init matching the PyTorch layers (uniform +-1/sqrt(fan_in)).

    Weights are stored as [in, out] (transposed from nn.Linear's [out, in]);
    biases as [1, out] rows.
    """
    dims = [(IN_DIM, HIDDEN), (HIDDEN, HIDDEN), (HIDDEN, OUT_DIM)]
    params = []
    for fan_in, fan_out in dims:
        key, kw, kb = jax.random.split(key, 3)
        bound = 1.0 / jnp.sqrt(float(fan_in))
        w = jax.random.uniform(kw, (fan_in, fan_out), jnp.float32, -bound, bound)
        b = jax.random.uniform(kb, (1, fan_out), jnp.float32, -bound, bound)
        params += [w, b]
    return tuple(params)


def reference_forward(state, params):
    w1, b1, w2, b2, w3, b3 = params
    h1 = jnp.maximum(state @ w1 + b1, 0.0)
    h2 = jnp.maximum(h1 @ w2 + b2, 0.0)
    return h2 @ w3 + b3


if __name__ == "__main__":
    key = jax.random.PRNGKey(0)
    key, k_small, k_big = jax.random.split(key, 3)

    params = init_params(key)

    # Small batch (single tile, padded batch rows).
    B = 8
    state = jax.random.normal(k_small, (B, IN_DIM), jnp.float32)
    out = jax.block_until_ready(critic_forward(state, params))
    ref = reference_forward(state, params)
    assert out.shape == (B, OUT_DIM), out.shape
    assert jnp.allclose(out, ref, atol=1e-4, rtol=1e-4), "mismatch (B=8)"

    # Larger batch exercising a multi-step grid + ragged tail padding.
    B2 = 1000
    state2 = jax.random.normal(k_big, (B2, IN_DIM), jnp.float32)
    out2 = jax.block_until_ready(critic_forward(state2, params))
    ref2 = reference_forward(state2, params)
    assert out2.shape == (B2, OUT_DIM), out2.shape
    assert jnp.allclose(out2, ref2, atol=1e-4, rtol=1e-4), "mismatch (B=1000)"

    print("KERNEL_OK")
</pallas_src>

<mosaic_0001>
module attributes {stable_mosaic.version = 11 : i64} {
  func.func @critic_kernel(%arg0: i32, %arg1: memref<256x4xf32, #tpu.memory_space<vmem>>, %arg2: memref<4x64xf32, #tpu.memory_space<vmem>>, %arg3: memref<1x64xf32, #tpu.memory_space<vmem>>, %arg4: memref<64x64xf32, #tpu.memory_space<vmem>>, %arg5: memref<1x64xf32, #tpu.memory_space<vmem>>, %arg6: memref<64x2xf32, #tpu.memory_space<vmem>>, %arg7: memref<1x2xf32, #tpu.memory_space<vmem>>, %arg8: memref<256x2xf32, #tpu.memory_space<vmem>>) attributes {dimension_semantics = [#tpu.dimension_semantics<parallel>], iteration_bounds = array<i64: 1>, scalar_prefetch = 0 : i64, scratch_operands = 0 : i64, tpu.core_type = #tpu.core_type<tc>, window_params = [{transform_indices = @transform_0, window_bounds = array<i64: 256, 4>}, {pipeline_mode = #tpu.pipeline_mode<synchronous>, transform_indices = @transform_1, window_bounds = array<i64: 4, 64>}, {pipeline_mode = #tpu.pipeline_mode<synchronous>, transform_indices = @transform_2, window_bounds = array<i64: 1, 64>}, {pipeline_mode = #tpu.pipeline_mode<synchronous>, transform_indices = @transform_3, window_bounds = array<i64: 64, 64>}, {pipeline_mode = #tpu.pipeline_mode<synchronous>, transform_indices = @transform_4, window_bounds = array<i64: 1, 64>}, {pipeline_mode = #tpu.pipeline_mode<synchronous>, transform_indices = @transform_5, window_bounds = array<i64: 64, 2>}, {pipeline_mode = #tpu.pipeline_mode<synchronous>, transform_indices = @transform_6, window_bounds = array<i64: 1, 2>}, {transform_indices = @transform_7, window_bounds = array<i64: 256, 2>}]} {
    %c0 = arith.constant 0 : index
    %c0_0 = arith.constant 0 : index
    %0 = vector.load %arg1[%c0, %c0_0] : memref<256x4xf32, #tpu.memory_space<vmem>>, vector<256x4xf32>
    %c0_1 = arith.constant 0 : index
    %c0_2 = arith.constant 0 : index
    %1 = vector.load %arg2[%c0_1, %c0_2] : memref<4x64xf32, #tpu.memory_space<vmem>>, vector<4x64xf32>
    %cst = arith.constant dense<0.000000e+00> : vector<256x64xf32>
    %2 = tpu.matmul %0, %1, %cst {dimension_numbers = #tpu.dot_dimension_numbers<[1], [0], [0], [1], [0, 0, 1, 1], [], []>} : vector<256x4xf32>, vector<4x64xf32>, vector<256x64xf32> -> vector<256x64xf32>
    %c0_3 = arith.constant 0 : index
    %c0_4 = arith.constant 0 : index
    %3 = vector.load %arg3[%c0_3, %c0_4] : memref<1x64xf32, #tpu.memory_space<vmem>>, vector<1x64xf32>
    %4 = vector.broadcast %3 : vector<1x64xf32> to vector<256x64xf32>
    %5 = arith.addf %2, %4 : vector<256x64xf32>
    %cst_5 = arith.constant 0.000000e+00 : f32
    %6 = vector.broadcast %cst_5 : f32 to vector<256x64xf32>
    %7 = arith.maximumf %5, %6 : vector<256x64xf32>
    %c0_6 = arith.constant 0 : index
    %c0_7 = arith.constant 0 : index
    %8 = vector.load %arg4[%c0_6, %c0_7] : memref<64x64xf32, #tpu.memory_space<vmem>>, vector<64x64xf32>
    %cst_8 = arith.constant dense<0.000000e+00> : vector<256x64xf32>
    %9 = tpu.matmul %7, %8, %cst_8 {dimension_numbers = #tpu.dot_dimension_numbers<[1], [0], [0], [1], [0, 0, 1, 1], [], []>} : vector<256x64xf32>, vector<64x64xf32>, vector<256x64xf32> -> vector<256x64xf32>
    %c0_9 = arith.constant 0 : index
    %c0_10 = arith.constant 0 : index
    %10 = vector.load %arg5[%c0_9, %c0_10] : memref<1x64xf32, #tpu.memory_space<vmem>>, vector<1x64xf32>
    %11 = vector.broadcast %10 : vector<1x64xf32> to vector<256x64xf32>
    %12 = arith.addf %9, %11 : vector<256x64xf32>
    %cst_11 = arith.constant 0.000000e+00 : f32
    %13 = vector.broadcast %cst_11 : f32 to vector<256x64xf32>
    %14 = arith.maximumf %12, %13 : vector<256x64xf32>
    %c0_12 = arith.constant 0 : index
    %c0_13 = arith.constant 0 : index
    %15 = vector.load %arg6[%c0_12, %c0_13] : memref<64x2xf32, #tpu.memory_space<vmem>>, vector<64x2xf32>
    %cst_14 = arith.constant dense<0.000000e+00> : vector<256x2xf32>
    %16 = tpu.matmul %14, %15, %cst_14 {dimension_numbers = #tpu.dot_dimension_numbers<[1], [0], [0], [1], [0, 0, 1, 1], [], []>} : vector<256x64xf32>, vector<64x2xf32>, vector<256x2xf32> -> vector<256x2xf32>
    %c0_15 = arith.constant 0 : index
    %c0_16 = arith.constant 0 : index
    %17 = vector.load %arg7[%c0_15, %c0_16] : memref<1x2xf32, #tpu.memory_space<vmem>>, vector<1x2xf32>
    %18 = vector.broadcast %17 : vector<1x2xf32> to vector<256x2xf32>
    %19 = arith.addf %16, %18 : vector<256x2xf32>
    %c0_17 = arith.constant 0 : index
    %c0_18 = arith.constant 0 : index
    %20 = vector.load %arg8[%c0_17, %c0_18] : memref<256x2xf32, #tpu.memory_space<vmem>>, vector<256x2xf32>
    tpu.vector_store %arg8[%c0_17, %c0_18], %19 {strides = array<i32>} : memref<256x2xf32, #tpu.memory_space<vmem>>, vector<256x2xf32>,
    return
  }
  func.func @transform_0(%arg0: i32) -> (i32, i32) {
    %c0_i32 = arith.constant 0 : i32
    %c0_i32_0 = arith.constant 0 : i32
    return %arg0, %c0_i32 : i32, i32
  }
  func.func @transform_1(%arg0: i32) -> (i32, i32) {
    %c0_i32 = arith.constant 0 : i32
    %c0_i32_0 = arith.constant 0 : i32
    %c0_i32_1 = arith.constant 0 : i32
    return %c0_i32, %c0_i32_0 : i32, i32
  }
  func.func @transform_2(%arg0: i32) -> (i32, i32) {
    %c0_i32 = arith.constant 0 : i32
    %c0_i32_0 = arith.constant 0 : i32
    %c0_i32_1 = arith.constant 0 : i32
    return %c0_i32, %c0_i32_0 : i32, i32
  }
  func.func @transform_3(%arg0: i32) -> (i32, i32) {
    %c0_i32 = arith.constant 0 : i32
    %c0_i32_0 = arith.constant 0 : i32
    %c0_i32_1 = arith.constant 0 : i32
    return %c0_i32, %c0_i32_0 : i32, i32
  }
  func.func @transform_4(%arg0: i32) -> (i32, i32) {
    %c0_i32 = arith.constant 0 : i32
    %c0_i32_0 = arith.constant 0 : i32
    %c0_i32_1 = arith.constant 0 : i32
    return %c0_i32, %c0_i32_0 : i32, i32
  }
  func.func @transform_5(%arg0: i32) -> (i32, i32) {
    %c0_i32 = arith.constant 0 : i32
    %c0_i32_0 = arith.constant 0 : i32
    %c0_i32_1 = arith.constant 0 : i32
    return %c0_i32, %c0_i32_0 : i32, i32
  }
  func.func @transform_6(%arg0: i32) -> (i32, i32) {
    %c0_i32 = arith.constant 0 : i32
    %c0_i32_0 = arith.constant 0 : i32
    %c0_i32_1 = arith.constant 0 : i32
    return %c0_i32, %c0_i32_0 : i32, i32
  }
  func.func @transform_7(%arg0: i32) -> (i32, i32) {
    %c0_i32 = arith.constant 0 : i32
    %c0_i32_0 = arith.constant 0 : i32
    return %arg0, %c0_i32 : i32, i32
  }
}

</mosaic_0001>

<llo_original>
// kernel: critic_forward.1
$region0: #{critic_forward.1}
  #allocation0 [shape = 'u32[]', space=smem, size = 0x4, offset = 0x4, fixed_abs, tag = 'smem constant byte address 0x4 - core index']
  #allocation1 [shape = 'u32[144,128]{1,0:T(1,128)}', space=vmem, size = 0x12000, scoped, tag = 'internal scratch']
  %s0 = inlined_call_operand.vmem [shape: f32[256,4], index: 0, kind: input, shape index: {}]
  %s1 = inlined_call_operand.vmem [shape: f32[4,64], index: 1, kind: input, shape index: {}]
  %s2 = inlined_call_operand.vmem [shape: f32[1,64], index: 2, kind: input, shape index: {}]
  %s3 = inlined_call_operand.vmem [shape: f32[64,64], index: 3, kind: input, shape index: {}]
  %s4 = inlined_call_operand.vmem [shape: f32[1,64], index: 4, kind: input, shape index: {}]
  %s5 = inlined_call_operand.vmem [shape: f32[64,2], index: 5, kind: input, shape index: {}]
  %s6 = inlined_call_operand.vmem [shape: f32[1,2], index: 6, kind: input, shape index: {}]
  %s7 = inlined_call_operand.vmem [shape: f32[256,2], index: 7, kind: output, shape index: {}]
  %s8 = sld [smem:[#allocation0]]
  $region38: #{critic_forward.1} parent=0
    _
  %s10 = ssub.s32 1, %s8
  %s11 = scalar_select 0, %s10, %s8
  // Predicated region
  $region2: #{critic_forward.1} parent=0 // pred_check
    _
  $region3: #{critic_forward.1} parent=0 // pred_check_branch
    %13 = sbr.rel (0) target = $region5
  $region4: #{critic_forward.1} parent=0 // pred_region
    _
  $region5: #{critic_forward.1} parent=0 // pred_fallthru
    _
  // Predicated region
  $region6: #{critic_forward.1} parent=0 // pred_check
    _
  $region7: #{critic_forward.1} parent=0 // pred_check_branch
    %15 = sbr.rel (0) target = $region9
  $region8: #{critic_forward.1} parent=0 // pred_region
    _
  $region9: #{critic_forward.1} parent=0 // pred_fallthru
    _
  // Predicated region
  $region10: #{critic_forward.1} parent=0 // pred_check
    _
  $region11: #{critic_forward.1} parent=0 // pred_check_branch
    %17 = sbr.rel (0) target = $region13
  $region12: #{critic_forward.1} parent=0 // pred_region
    _
  $region13: #{critic_forward.1} parent=0 // pred_fallthru
    _
  // Predicated region
  $region14: #{critic_forward.1} parent=0 // pred_check
    _
  $region15: #{critic_forward.1} parent=0 // pred_check_branch
    %19 = sbr.rel (0) target = $region17
  $region16: #{critic_forward.1} parent=0 // pred_region
    _
  $region17: #{critic_forward.1} parent=0 // pred_fallthru
    _
  // Predicated region
  $region18: #{critic_forward.1} parent=0 // pred_check
    _
  $region19: #{critic_forward.1} parent=0 // pred_check_branch
    %21 = sbr.rel (0) target = $region21
  $region20: #{critic_forward.1} parent=0 // pred_region
    _
  $region21: #{critic_forward.1} parent=0 // pred_fallthru
    _
  // Predicated region
  $region22: #{critic_forward.1} parent=0 // pred_check
    _
  $region23: #{critic_forward.1} parent=0 // pred_check_branch
    %23 = sbr.rel (0) target = $region25
  $region24: #{critic_forward.1} parent=0 // pred_region
    _
  $region25: #{critic_forward.1} parent=0 // pred_fallthru
    _
  // Predicated region
  $region26: #{critic_forward.1} parent=0 // pred_check
    _
  $region27: #{critic_forward.1} parent=0 // pred_check_branch
    %25 = sbr.rel (0) target = $region29
  $region28: #{critic_forward.1} parent=0 // pred_region
    _
  $region29: #{critic_forward.1} parent=0 // pred_fallthru
    _
  %v26 = vld [vmem:[%s0] sm:$0xff]
  %v27 = vld [vmem:[%s0 + $0x8] sm:$0xff]
  %v28 = vld [vmem:[%s0 + $0x10] sm:$0xff]
  %v29 = vld [vmem:[%s0 + $0x18] sm:$0xff]
  %v30 = vld [vmem:[%s0 + $0x20] sm:$0xff]
  %v31 = vld [vmem:[%s0 + $0x28] sm:$0xff]
  %v32 = vld [vmem:[%s0 + $0x30] sm:$0xff]
  %v33 = vld [vmem:[%s0 + $0x38] sm:$0xff]
  %v34 = vld [vmem:[%s0 + $0x40] sm:$0xff]
  %v35 = vld [vmem:[%s0 + $0x48] sm:$0xff]
  %v36 = vld [vmem:[%s0 + $0x50] sm:$0xff]
  %v37 = vld [vmem:[%s0 + $0x58] sm:$0xff]
  %v38 = vld [vmem:[%s0 + $0x60] sm:$0xff]
  %v39 = vld [vmem:[%s0 + $0x68] sm:$0xff]
  %v40 = vld [vmem:[%s0 + $0x70] sm:$0xff]
  %v41 = vld [vmem:[%s0 + $0x78] sm:$0xff]
  %v42 = vld [vmem:[%s0 + $0x80] sm:$0xff]
  %v43 = vld [vmem:[%s0 + $0x88] sm:$0xff]
  %v44 = vld [vmem:[%s0 + $0x90] sm:$0xff]
  %v45 = vld [vmem:[%s0 + $0x98] sm:$0xff]
  %v46 = vld [vmem:[%s0 + $0xa0] sm:$0xff]
  %v47 = vld [vmem:[%s0 + $0xa8] sm:$0xff]
  %v48 = vld [vmem:[%s0 + $0xb0] sm:$0xff]
  %v49 = vld [vmem:[%s0 + $0xb8] sm:$0xff]
  %v50 = vld [vmem:[%s0 + $0xc0] sm:$0xff]
  %v51 = vld [vmem:[%s0 + $0xc8] sm:$0xff]
  %v52 = vld [vmem:[%s0 + $0xd0] sm:$0xff]
  %v53 = vld [vmem:[%s0 + $0xd8] sm:$0xff]
  %v54 = vld [vmem:[%s0 + $0xe0] sm:$0xff]
  %v55 = vld [vmem:[%s0 + $0xe8] sm:$0xff]
  %v56 = vld [vmem:[%s0 + $0xf0] sm:$0xff]
  %v57 = vld [vmem:[%s0 + $0xf8] sm:$0xff]
  %v58 = vld [vmem:[%s1] sm:$0xf]
  %v59 = vld [vmem:[%s2] sm:$0x1]
  %v61 = vlaneseq
  %v62 = vshrl.u32 %v61, 7
  %v63 = vsub.s32 0, %v62
  %v64 = vrot.slane %v59, %v63
  %vm66 = vcmask 31744
  %v68 = vsel %vm66, %v26, 0
  %v71 = vsel %vm66, %v27, 0
  %v74 = vsel %vm66, %v28, 0
  %v77 = vsel %vm66, %v29, 0
  %v80 = vsel %vm66, %v30, 0
  %v83 = vsel %vm66, %v31, 0
  %v86 = vsel %vm66, %v32, 0
  %v89 = vsel %vm66, %v33, 0
  %v92 = vsel %vm66, %v34, 0
  %v95 = vsel %vm66, %v35, 0
  %v98 = vsel %vm66, %v36, 0
  %v101 = vsel %vm66, %v37, 0
  %v104 = vsel %vm66, %v38, 0
  %v107 = vsel %vm66, %v39, 0
  %v110 = vsel %vm66, %v40, 0
  %v113 = vsel %vm66, %v41, 0
  %v116 = vsel %vm66, %v42, 0
  %v119 = vsel %vm66, %v43, 0
  %v122 = vsel %vm66, %v44, 0
  %v125 = vsel %vm66, %v45, 0
  %v128 = vsel %vm66, %v46, 0
  %v131 = vsel %vm66, %v47, 0
  %v134 = vsel %vm66, %v48, 0
  %v137 = vsel %vm66, %v49, 0
  %v140 = vsel %vm66, %v50, 0
  %v143 = vsel %vm66, %v51, 0
  %v146 = vsel %vm66, %v52, 0
  %v149 = vsel %vm66, %v53, 0
  %v152 = vsel %vm66, %v54, 0
  %v155 = vsel %vm66, %v55, 0
  %v158 = vsel %vm66, %v56, 0
  %v161 = vsel %vm66, %v57, 0
  %vm163 = vcmask 1043456
  %v165 = vsel %vm163, %v58, 0
  %167 = vmatprep.subr.mxu0 0.0
  %168 = vmatpush1.msra.mxu0 %v165
  %169 = vmatprep.subr.mxu0 0.0
  %170 = vmatpush1.msra.mxu0 0.0
  %171 = vmatprep.subr.mxu0 0.0
  %172 = vmatpush1.msra.mxu0 0.0
  %173 = vmatprep.subr.mxu0 0.0
  %174 = vmatpush1.msra.mxu0 0.0
  %175 = vmatprep.subr.mxu0 0.0
  %176 = vmatpush1.msra.mxu0 0.0
  %177 = vmatprep.subr.mxu0 0.0
  %178 = vmatpush1.msra.mxu0 0.0
  %179 = vmatprep.subr.mxu0 0.0
  %180 = vmatpush1.msra.mxu0 0.0
  %181 = vmatprep.subr.mxu0 0.0
  %182 = vmatpush1.msra.mxu0 0.0
  %183 = vmatprep.subr.mxu0 0.0
  %184 = vmatpush1.msra.mxu0 0.0
  %185 = vmatprep.subr.mxu0 0.0
  %186 = vmatpush1.msra.mxu0 0.0
  %187 = vmatprep.subr.mxu0 0.0
  %188 = vmatpush1.msra.mxu0 0.0
  %189 = vmatprep.subr.mxu0 0.0
  %190 = vmatpush1.msra.mxu0 0.0
  %191 = vmatprep.subr.mxu0 0.0
  %192 = vmatpush1.msra.mxu0 0.0
  %193 = vmatprep.subr.mxu0 0.0
  %194 = vmatpush1.msra.mxu0 0.0
  %195 = vmatprep.subr.mxu0 0.0
  %196 = vmatpush1.msra.mxu0 0.0
  %197 = vmatprep.subr.mxu0 0.0
  %198 = vmatpush1.msra.mxu0 0.0
  %199 = vmatprep.subr.mxu0 0.0
  %200 = vmatpush1.msra.mxu0 0.0
  %201 = vmatprep.subr.mxu0 0.0
  %202 = vmatpush1.msra.mxu0 0.0
  %203 = vmatprep.subr.mxu0 0.0
  %204 = vmatpush1.msra.mxu0 0.0
  %205 = vmatprep.subr.mxu0 0.0
  %206 = vmatpush1.msra.mxu0 0.0
  %207 = vmatprep.subr.mxu0 0.0
  %208 = vmatpush1.msra.mxu0 0.0
  %209 = vmatprep.subr.mxu0 0.0
  %210 = vmatpush1.msra.mxu0 0.0
  %211 = vmatprep.subr.mxu0 0.0
  %212 = vmatpush1.msra.mxu0 0.0
  %213 = vmatprep.subr.mxu0 0.0
  %214 = vmatpush1.msra.mxu0 0.0
  %215 = vmatprep.subr.mxu0 0.0
  %216 = vmatpush1.msra.mxu0 0.0
  %217 = vmatprep.subr.mxu0 0.0
  %218 = vmatpush1.msra.mxu0 0.0
  %219 = vmatprep.subr.mxu0 0.0
  %220 = vmatpush1.msra.mxu0 0.0
  %221 = vmatprep.subr.mxu0 0.0
  %222 = vmatpush1.msra.mxu0 0.0
  %223 = vmatprep.subr.mxu0 0.0
  %224 = vmatpush1.msra.mxu0 0.0
  %225 = vmatprep.subr.mxu0 0.0
  %226 = vmatpush1.msra.mxu0 0.0
  %227 = vmatprep.subr.mxu0 0.0
  %228 = vmatpush1.msra.mxu0 0.0
  %229 = vmatprep.subr.mxu0 0.0
  %230 = vmatpush1.msra.mxu0 0.0
  %231 = vmatprep.mubr.f32.mxu0 0.0
  %232 = vmatmul.mubr.f32.gmra.mrb[0].mxu0 %v68
  %v233 = vpop.f32.mrb[0].mxu0
  %v234 = vadd.f32 %v64, %v233
  %v235 = vpop.f32.mrb[0].mxu0
  %236 = vmatprep.mubr.f32.mxu0 0.0
  %237 = vmatmul.mubr.f32.gmra.mrb[0].mxu0 %v71
  %v238 = vpop.f32.mrb[0].mxu0
  %v239 = vadd.f32 %v64, %v238
  %v240 = vpop.f32.mrb[0].mxu0
  %241 = vmatprep.mubr.f32.mxu0 0.0
  %242 = vmatmul.mubr.f32.gmra.mrb[0].mxu0 %v74
  %v243 = vpop.f32.mrb[0].mxu0
  %v244 = vadd.f32 %v64, %v243
  %v245 = vpop.f32.mrb[0].mxu0
  %246 = vmatprep.mubr.f32.mxu0 0.0
  %247 = vmatmul.mubr.f32.gmra.mrb[0].mxu0 %v77
  %v248 = vpop.f32.mrb[0].mxu0
  %v249 = vadd.f32 %v64, %v248
  %v250 = vpop.f32.mrb[0].mxu0
  %251 = vmatprep.mubr.f32.mxu0 0.0
  %252 = vmatmul.mubr.f32.gmra.mrb[0].mxu0 %v80
  %v253 = vpop.f32.mrb[0].mxu0
  %v254 = vadd.f32 %v64, %v253
  %v255 = vpop.f32.mrb[0].mxu0
  %256 = vmatprep.mubr.f32.mxu0 0.0
  %257 = vmatmul.mubr.f32.gmra.mrb[0].mxu0 %v83
  %v258 = vpop.f32.mrb[0].mxu0
  %v259 = vadd.f32 %v64, %v258
  %v260 = vpop.f32.mrb[0].mxu0
  %261 = vmatprep.mubr.f32.mxu0 0.0
  %262 = vmatmul.mubr.f32.gmra.mrb[0].mxu0 %v86
  %v263 = vpop.f32.mrb[0].mxu0
  %v264 = vadd.f32 %v64, %v263
  %v265 = vpop.f32.mrb[0].mxu0
  %266 = vmatprep.mubr.f32.mxu0 0.0
  %267 = vmatmul.mubr.f32.gmra.mrb[0].mxu0 %v89
  %v268 = vpop.f32.mrb[0].mxu0
  %v269 = vadd.f32 %v64, %v268
  %v270 = vpop.f32.mrb[0].mxu0
  %271 = vmatprep.mubr.f32.mxu0 0.0
  %272 = vmatmul.mubr.f32.gmra.mrb[0].mxu0 %v92
  %v273 = vpop.f32.mrb[0].mxu0
  %v274 = vadd.f32 %v64, %v273
  %v275 = vpop.f32.mrb[0].mxu0
  %276 = vmatprep.mubr.f32.mxu0 0.0
  %277 = vmatmul.mubr.f32.gmra.mrb[0].mxu0 %v95
  %v278 = vpop.f32.mrb[0].mxu0
  %v279 = vadd.f32 %v64, %v278
  %v280 = vpop.f32.mrb[0].mxu0
  %281 = vmatprep.mubr.f32.mxu0 0.0
  %282 = vmatmul.mubr.f32.gmra.mrb[0].mxu0 %v98
  %v283 = vpop.f32.mrb[0].mxu0
  %v284 = vadd.f32 %v64, %v283
  %v285 = vpop.f32.mrb[0].mxu0
  %286 = vmatprep.mubr.f32.mxu0 0.0
  %287 = vmatmul.mubr.f32.gmra.mrb[0].mxu0 %v101
  %v288 = vpop.f32.mrb[0].mxu0
  %v289 = vadd.f32 %v64, %v288
  %v290 = vpop.f32.mrb[0].mxu0
  %291 = vmatprep.mubr.f32.mxu0 0.0
  %292 = vmatmul.mubr.f32.gmra.mrb[0].mxu0 %v104
  %v293 = vpop.f32.mrb[0].mxu0
  %v294 = vadd.f32 %v64, %v293
  %v295 = vpop.f32.mrb[0].mxu0
  %296 = vmatprep.mubr.f32.mxu0 0.0
  %297 = vmatmul.mubr.f32.gmra.mrb[0].mxu0 %v107
  %v298 = vpop.f32.mrb[0].mxu0
  %v299 = vadd.f32 %v64, %v298
  %v300 = vpop.f32.mrb[0].mxu0
  %301 = vmatprep.mubr.f32.mxu0 0.0
  %302 = vmatmul.mubr.f32.gmra.mrb[0].mxu0 %v110
  %v303 = vpop.f32.mrb[0].mxu0
  %v304 = vadd.f32 %v64, %v303
  %v305 = vpop.f32.mrb[0].mxu0
  %306 = vmatprep.mubr.f32.mxu0 0.0
  %307 = vmatmul.mubr.f32.gmra.mrb[0].mxu0 %v113
  %v308 = vpop.f32.mrb[0].mxu0
  %v309 = vadd.f32 %v64, %v308
  %v310 = vpop.f32.mrb[0].mxu0
  %311 = vmatprep.mubr.f32.mxu0 0.0
  %312 = vmatmul.mubr.f32.gmra.mrb[0].mxu0 %v116
  %v313 = vpop.f32.mrb[0].mxu0
  %v314 = vadd.f32 %v64, %v313
  %v315 = vpop.f32.mrb[0].mxu0
  %316 = vmatprep.mubr.f32.mxu0 0.0
  %317 = vmatmul.mubr.f32.gmra.mrb[0].mxu0 %v119
  %v318 = vpop.f32.mrb[0].mxu0
  %v319 = vadd.f32 %v64, %v318
  %v320 = vpop.f32.mrb[0].mxu0
  %321 = vmatprep.mubr.f32.mxu0 0.0
  %322 = vmatmul.mubr.f32.gmra.mrb[0].mxu0 %v122
  %v323 = vpop.f32.mrb[0].mxu0
  %v324 = vadd.f32 %v64, %v323
  %v325 = vpop.f32.mrb[0].mxu0
  %326 = vmatprep.mubr.f32.mxu0 0.0
  %327 = vmatmul.mubr.f32.gmra.mrb[0].mxu0 %v125
  %v328 = vpop.f32.mrb[0].mxu0
  %v329 = vadd.f32 %v64, %v328
  %v330 = vpop.f32.mrb[0].mxu0
  %331 = vmatprep.mubr.f32.mxu0 0.0
  %332 = vmatmul.mubr.f32.gmra.mrb[0].mxu0 %v128
  %v333 = vpop.f32.mrb[0].mxu0
  %v334 = vadd.f32 %v64, %v333
  %v335 = vpop.f32.mrb[0].mxu0
  %336 = vmatprep.mubr.f32.mxu0 0.0
  %337 = vmatmul.mubr.f32.gmra.mrb[0].mxu0 %v131
  %v338 = vpop.f32.mrb[0].mxu0
  %v339 = vadd.f32 %v64, %v338
  %v340 = vpop.f32.mrb[0].mxu0
  %341 = vmatprep.mubr.f32.mxu0 0.0
  %342 = vmatmul.mubr.f32.gmra.mrb[0].mxu0 %v134
  %v343 = vpop.f32.mrb[0].mxu0
  %v344 = vadd.f32 %v64, %v343
  %v345 = vpop.f32.mrb[0].mxu0
  %346 = vmatprep.mubr.f32.mxu0 0.0
  %347 = vmatmul.mubr.f32.gmra.mrb[0].mxu0 %v137
  %v348 = vpop.f32.mrb[0].mxu0
  %v349 = vadd.f32 %v64, %v348
  %v350 = vpop.f32.mrb[0].mxu0
  %351 = vmatprep.mubr.f32.mxu0 0.0
  %352 = vmatmul.mubr.f32.gmra.mrb[0].mxu0 %v140
  %v353 = vpop.f32.mrb[0].mxu0
  %v354 = vadd.f32 %v64, %v353
  %v355 = vpop.f32.mrb[0].mxu0
  %356 = vmatprep.mubr.f32.mxu0 0.0
  %357 = vmatmul.mubr.f32.gmra.mrb[0].mxu0 %v143
  %v358 = vpop.f32.mrb[0].mxu0
  %v359 = vadd.f32 %v64, %v358
  %v360 = vpop.f32.mrb[0].mxu0
  %361 = vmatprep.mubr.f32.mxu0 0.0
  %362 = vmatmul.mubr.f32.gmra.mrb[0].mxu0 %v146
  %v363 = vpop.f32.mrb[0].mxu0
  %v364 = vadd.f32 %v64, %v363
  %v365 = vpop.f32.mrb[0].mxu0
  %366 = vmatprep.mubr.f32.mxu0 0.0
  %367 = vmatmul.mubr.f32.gmra.mrb[0].mxu0 %v149
  %v368 = vpop.f32.mrb[0].mxu0
  %v369 = vadd.f32 %v64, %v368
  %v370 = vpop.f32.mrb[0].mxu0
  %371 = vmatprep.mubr.f32.mxu0 0.0
  %372 = vmatmul.mubr.f32.gmra.mrb[0].mxu0 %v152
  %v373 = vpop.f32.mrb[0].mxu0
  %v374 = vadd.f32 %v64, %v373
  %v375 = vpop.f32.mrb[0].mxu0
  %376 = vmatprep.mubr.f32.mxu0 0.0
  %377 = vmatmul.mubr.f32.gmra.mrb[0].mxu0 %v155
  %v378 = vpop.f32.mrb[0].mxu0
  %v379 = vadd.f32 %v64, %v378
  %v380 = vpop.f32.mrb[0].mxu0
  %381 = vmatprep.mubr.f32.mxu0 0.0
  %382 = vmatmul.mubr.f32.gmra.mrb[0].mxu0 %v158
  %v383 = vpop.f32.mrb[0].mxu0
  %v384 = vadd.f32 %v64, %v383
  %v385 = vpop.f32.mrb[0].mxu0
  %386 = vmatprep.mubr.f32.mxu0 0.0
  %387 = vmatmul.mubr.f32.gmra.mrb[0].mxu0 %v161
  %v388 = vpop.f32.mrb[0].mxu0
  %v389 = vadd.f32 %v64, %v388
  %v390 = vpop.f32.mrb[0].mxu0
  %391 = vdwg.mxu0
  %v392 = vmax.f32 %v234, 0.0
  %v393 = vmax.f32 %v239, 0.0
  %v394 = vmax.f32 %v244, 0.0
  %v395 = vmax.f32 %v249, 0.0
  %v396 = vmax.f32 %v254, 0.0
  %v397 = vmax.f32 %v259, 0.0
  %v398 = vmax.f32 %v264, 0.0
  %v399 = vmax.f32 %v269, 0.0
  %v400 = vmax.f32 %v274, 0.0
  %v401 = vmax.f32 %v279, 0.0
  %v402 = vmax.f32 %v284, 0.0
  %v403 = vmax.f32 %v289, 0.0
  %v404 = vmax.f32 %v294, 0.0
  %v405 = vmax.f32 %v299, 0.0
  %v406 = vmax.f32 %v304, 0.0
  %v407 = vmax.f32 %v309, 0.0
  %v408 = vmax.f32 %v314, 0.0
  %v409 = vmax.f32 %v319, 0.0
  %v410 = vmax.f32 %v324, 0.0
  %v411 = vmax.f32 %v329, 0.0
  %v412 = vmax.f32 %v334, 0.0
  %v413 = vmax.f32 %v339, 0.0
  %v414 = vmax.f32 %v344, 0.0
  %v415 = vmax.f32 %v349, 0.0
  %v416 = vmax.f32 %v354, 0.0
  %v417 = vmax.f32 %v359, 0.0
  %v418 = vmax.f32 %v364, 0.0
  %v419 = vmax.f32 %v369, 0.0
  %v420 = vmax.f32 %v374, 0.0
  %v421 = vmax.f32 %v379, 0.0
  %v422 = vmax.f32 %v384, 0.0
  %v423 = vmax.f32 %v389, 0.0
  %v424 = vld [vmem:[%s3] sm:$0xff]
  %v425 = vld [vmem:[%s3 + $0x8] sm:$0xff]
  %v426 = vld [vmem:[%s3 + $0x10] sm:$0xff]
  %v427 = vld [vmem:[%s3 + $0x18] sm:$0xff]
  %v428 = vld [vmem:[%s3 + $0x20] sm:$0xff]
  %v429 = vld [vmem:[%s3 + $0x28] sm:$0xff]
  %v430 = vld [vmem:[%s3 + $0x30] sm:$0xff]
  %v431 = vld [vmem:[%s3 + $0x38] sm:$0xff]
  %v432 = vld [vmem:[%s4] sm:$0x1]
  %v434 = vlaneseq
  %v435 = vshrl.u32 %v434, 7
  %v436 = vsub.s32 0, %v435
  %v437 = vrot.slane %v432, %v436
  %vm439 = vcmask 523264
  %v441 = vsel %vm439, %v392, 0
  %v444 = vsel %vm439, %v393, 0
  %v447 = vsel %vm439, %v394, 0
  %v450 = vsel %vm439, %v395, 0
  %v453 = vsel %vm439, %v396, 0
  %v456 = vsel %vm439, %v397, 0
  %v459 = vsel %vm439, %v398, 0
  %v462 = vsel %vm439, %v399, 0
  %v465 = vsel %vm439, %v400, 0
  %v468 = vsel %vm439, %v401, 0
  %v471 = vsel %vm439, %v402, 0
  %v474 = vsel %vm439, %v403, 0
  %v477 = vsel %vm439, %v404, 0
  %v480 = vsel %vm439, %v405, 0
  %v483 = vsel %vm439, %v406, 0
  %v486 = vsel %vm439, %v407, 0
  %v489 = vsel %vm439, %v408, 0
  %v492 = vsel %vm439, %v409, 0
  %v495 = vsel %vm439, %v410, 0
  %v498 = vsel %vm439, %v411, 0
  %v501 = vsel %vm439, %v412, 0
  %v504 = vsel %vm439, %v413, 0
  %v507 = vsel %vm439, %v414, 0
  %v510 = vsel %vm439, %v415, 0
  %v513 = vsel %vm439, %v416, 0
  %v516 = vsel %vm439, %v417, 0
  %v519 = vsel %vm439, %v418, 0
  %v522 = vsel %vm439, %v419, 0
  %v525 = vsel %vm439, %v420, 0
  %v528 = vsel %vm439, %v421, 0
  %v531 = vsel %vm439, %v422, 0
  %v534 = vsel %vm439, %v423, 0
  %536 = vmatprep.subr.mxu0 0.0
  %537 = vmatpush1.msra.mxu0 %v424
  %538 = vmatprep.subr.mxu0 0.0
  %539 = vmatpush1.msra.mxu0 %v425
  %540 = vmatprep.subr.mxu0 0.0
  %541 = vmatpush1.msra.mxu0 %v426
  %542 = vmatprep.subr.mxu0 0.0
  %543 = vmatpush1.msra.mxu0 %v427
  %544 = vmatprep.subr.mxu0 0.0
  %545 = vmatpush1.msra.mxu0 %v428
  %546 = vmatprep.subr.mxu0 0.0
  %547 = vmatpush1.msra.mxu0 %v429
  %548 = vmatprep.subr.mxu0 0.0
  %549 = vmatpush1.msra.mxu0 %v430
  %550 = vmatprep.subr.mxu0 0.0
  %551 = vmatpush1.msra.mxu0 %v431
  %552 = vmatprep.subr.mxu0 0.0
  %553 = vmatpush1.msra.mxu0 0.0
  %554 = vmatprep.subr.mxu0 0.0
  %555 = vmatpush1.msra.mxu0 0.0
  %556 = vmatprep.subr.mxu0 0.0
  %557 = vmatpush1.msra.mxu0 0.0
  %558 = vmatprep.subr.mxu0 0.0
  %559 = vmatpush1.msra.mxu0 0.0
  %560 = vmatprep.subr.mxu0 0.0
  %561 = vmatpush1.msra.mxu0 0.0
  %562 = vmatprep.subr.mxu0 0.0
  %563 = vmatpush1.msra.mxu0 0.0
  %564 = vmatprep.subr.mxu0 0.0
  %565 = vmatpush1.msra.mxu0 0.0
  %566 = vmatprep.subr.mxu0 0.0
  %567 = vmatpush1.msra.mxu0 0.0
  %568 = vmatprep.subr.mxu0 0.0
  %569 = vmatpush1.msra.mxu0 0.0
  %570 = vmatprep.subr.mxu0 0.0
  %571 = vmatpush1.msra.mxu0 0.0
  %572 = vmatprep.subr.mxu0 0.0
  %573 = vmatpush1.msra.mxu0 0.0
  %574 = vmatprep.subr.mxu0 0.0
  %575 = vmatpush1.msra.mxu0 0.0
  %576 = vmatprep.subr.mxu0 0.0
  %577 = vmatpush1.msra.mxu0 0.0
  %578 = vmatprep.subr.mxu0 0.0
  %579 = vmatpush1.msra.mxu0 0.0
  %580 = vmatprep.subr.mxu0 0.0
  %581 = vmatpush1.msra.mxu0 0.0
  %582 = vmatprep.subr.mxu0 0.0
  %583 = vmatpush1.msra.mxu0 0.0
  %584 = vmatprep.subr.mxu0 0.0
  %585 = vmatpush1.msra.mxu0 0.0
  %586 = vmatprep.subr.mxu0 0.0
  %587 = vmatpush1.msra.mxu0 0.0
  %588 = vmatprep.subr.mxu0 0.0
  %589 = vmatpush1.msra.mxu0 0.0
  %590 = vmatprep.subr.mxu0 0.0
  %591 = vmatpush1.msra.mxu0 0.0
  %592 = vmatprep.subr.mxu0 0.0
  %593 = vmatpush1.msra.mxu0 0.0
  %594 = vmatprep.subr.mxu0 0.0
  %595 = vmatpush1.msra.mxu0 0.0
  %596 = vmatprep.subr.mxu0 0.0
  %597 = vmatpush1.msra.mxu0 0.0
  %598 = vmatprep.subr.mxu0 0.0
  %599 = vmatpush1.msra.mxu0 0.0
  %600 = vmatprep.mubr.f32.mxu0 0.0
  %601 = vmatmul.mubr.f32.gmra.mrb[0].mxu0 %v441
  %v602 = vpop.f32.mrb[0].mxu0
  %v603 = vadd.f32 %v437, %v602
  %v604 = vpop.f32.mrb[0].mxu0
  %605 = vmatprep.mubr.f32.mxu0 0.0
  %606 = vmatmul.mubr.f32.gmra.mrb[0].mxu0 %v444
  %v607 = vpop.f32.mrb[0].mxu0
  %v608 = vadd.f32 %v437, %v607
  %v609 = vpop.f32.mrb[0].mxu0
  %610 = vmatprep.mubr.f32.mxu0 0.0
  %611 = vmatmul.mubr.f32.gmra.mrb[0].mxu0 %v447
  %v612 = vpop.f32.mrb[0].mxu0
  %v613 = vadd.f32 %v437, %v612
  %v614 = vpop.f32.mrb[0].mxu0
  %615 = vmatprep.mubr.f32.mxu0 0.0
  %616 = vmatmul.mubr.f32.gmra.mrb[0].mxu0 %v450
  %v617 = vpop.f32.mrb[0].mxu0
  %v618 = vadd.f32 %v437, %v617
  %v619 = vpop.f32.mrb[0].mxu0
  %620 = vmatprep.mubr.f32.mxu0 0.0
  %621 = vmatmul.mubr.f32.gmra.mrb[0].mxu0 %v453
  %v622 = vpop.f32.mrb[0].mxu0
  %v623 = vadd.f32 %v437, %v622
  %v624 = vpop.f32.mrb[0].mxu0
  %625 = vmatprep.mubr.f32.mxu0 0.0
  %626 = vmatmul.mubr.f32.gmra.mrb[0].mxu0 %v456
  %v627 = vpop.f32.mrb[0].mxu0
  %v628 = vadd.f32 %v437, %v627
  %v629 = vpop.f32.mrb[0].mxu0
  %630 = vmatprep.mubr.f32.mxu0 0.0
  %631 = vmatmul.mubr.f32.gmra.mrb[0].mxu0 %v459
  %v632 = vpop.f32.mrb[0].mxu0
  %v633 = vadd.f32 %v437, %v632
  %v634 = vpop.f32.mrb[0].mxu0
  %635 = vmatprep.mubr.f32.mxu0 0.0
  %636 = vmatmul.mubr.f32.gmra.mrb[0].mxu0 %v462
  %v637 = vpop.f32.mrb[0].mxu0
  %v638 = vadd.f32 %v437, %v637
  %v639 = vpop.f32.mrb[0].mxu0
  %640 = vmatprep.mubr.f32.mxu0 0.0
  %641 = vmatmul.mubr.f32.gmra.mrb[0].mxu0 %v465
  %v642 = vpop.f32.mrb[0].mxu0
  %v643 = vadd.f32 %v437, %v642
  %v644 = vpop.f32.mrb[0].mxu0
  %645 = vmatprep.mubr.f32.mxu0 0.0
  %646 = vmatmul.mubr.f32.gmra.mrb[0].mxu0 %v468
  %v647 = vpop.f32.mrb[0].mxu0
  %v648 = vadd.f32 %v437, %v647
  %v649 = vpop.f32.mrb[0].mxu0
  %650 = vmatprep.mubr.f32.mxu0 0.0
  %651 = vmatmul.mubr.f32.gmra.mrb[0].mxu0 %v471
  %v652 = vpop.f32.mrb[0].mxu0
  %v653 = vadd.f32 %v437, %v652
  %v654 = vpop.f32.mrb[0].mxu0
  %655 = vmatprep.mubr.f32.mxu0 0.0
  %656 = vmatmul.mubr.f32.gmra.mrb[0].mxu0 %v474
  %v657 = vpop.f32.mrb[0].mxu0
  %v658 = vadd.f32 %v437, %v657
  %v659 = vpop.f32.mrb[0].mxu0
  %660 = vmatprep.mubr.f32.mxu0 0.0
  %661 = vmatmul.mubr.f32.gmra.mrb[0].mxu0 %v477
  %v662 = vpop.f32.mrb[0].mxu0
  %v663 = vadd.f32 %v437, %v662
  %v664 = vpop.f32.mrb[0].mxu0
  %665 = vmatprep.mubr.f32.mxu0 0.0
  %666 = vmatmul.mubr.f32.gmra.mrb[0].mxu0 %v480
  %v667 = vpop.f32.mrb[0].mxu0
  %v668 = vadd.f32 %v437, %v667
  %v669 = vpop.f32.mrb[0].mxu0
  %670 = vmatprep.mubr.f32.mxu0 0.0
  %671 = vmatmul.mubr.f32.gmra.mrb[0].mxu0 %v483
  %v672 = vpop.f32.mrb[0].mxu0
  %v673 = vadd.f32 %v437, %v672
  %v674 = vpop.f32.mrb[0].mxu0
  %675 = vmatprep.mubr.f32.mxu0 0.0
  %676 = vmatmul.mubr.f32.gmra.mrb[0].mxu0 %v486
  %v677 = vpop.f32.mrb[0].mxu0
  %v678 = vadd.f32 %v437, %v677
  %v679 = vpop.f32.mrb[0].mxu0
  %680 = vmatprep.mubr.f32.mxu0 0.0
  %681 = vmatmul.mubr.f32.gmra.mrb[0].mxu0 %v489
  %v682 = vpop.f32.mrb[0].mxu0
  %v683 = vadd.f32 %v437, %v682
  %v684 = vpop.f32.mrb[0].mxu0
  %685 = vmatprep.mubr.f32.mxu0 0.0
  %686 = vmatmul.mubr.f32.gmra.mrb[0].mxu0 %v492
  %v687 = vpop.f32.mrb[0].mxu0
  %v688 = vadd.f32 %v437, %v687
  %v689 = vpop.f32.mrb[0].mxu0
  %690 = vmatprep.mubr.f32.mxu0 0.0
  %691 = vmatmul.mubr.f32.gmra.mrb[0].mxu0 %v495
  %v692 = vpop.f32.mrb[0].mxu0
  %v693 = vadd.f32 %v437, %v692
  %v694 = vpop.f32.mrb[0].mxu0
  %695 = vmatprep.mubr.f32.mxu0 0.0
  %696 = vmatmul.mubr.f32.gmra.mrb[0].mxu0 %v498
  %v697 = vpop.f32.mrb[0].mxu0
  %v698 = vadd.f32 %v437, %v697
  %v699 = vpop.f32.mrb[0].mxu0
  %700 = vmatprep.mubr.f32.mxu0 0.0
  %701 = vmatmul.mubr.f32.gmra.mrb[0].mxu0 %v501
  %v702 = vpop.f32.mrb[0].mxu0
  %v703 = vadd.f32 %v437, %v702
  %v704 = vpop.f32.mrb[0].mxu0
  %705 = vmatprep.mubr.f32.mxu0 0.0
  %706 = vmatmul.mubr.f32.gmra.mrb[0].mxu0 %v504
  %v707 = vpop.f32.mrb[0].mxu0
  %v708 = vadd.f32 %v437, %v707
  %v709 = vpop.f32.mrb[0].mxu0
  %710 = vmatprep.mubr.f32.mxu0 0.0
  %711 = vmatmul.mubr.f32.gmra.mrb[0].mxu0 %v507
  %v712 = vpop.f32.mrb[0].mxu0
  %v713 = vadd.f32 %v437, %v712
  %v714 = vpop.f32.mrb[0].mxu0
  %715 = vmatprep.mubr.f32.mxu0 0.0
  %716 = vmatmul.mubr.f32.gmra.mrb[0].mxu0 %v510
  %v717 = vpop.f32.mrb[0].mxu0
  %v718 = vadd.f32 %v437, %v717
  %v719 = vpop.f32.mrb[0].mxu0
  %720 = vmatprep.mubr.f32.mxu0 0.0
  %721 = vmatmul.mubr.f32.gmra.mrb[0].mxu0 %v513
  %v722 = vpop.f32.mrb[0].mxu0
  %v723 = vadd.f32 %v437, %v722
  %v724 = vpop.f32.mrb[0].mxu0
  %725 = vmatprep.mubr.f32.mxu0 0.0
  %726 = vmatmul.mubr.f32.gmra.mrb[0].mxu0 %v516
  %v727 = vpop.f32.mrb[0].mxu0
  %v728 = vadd.f32 %v437, %v727
  %v729 = vpop.f32.mrb[0].mxu0
  %730 = vmatprep.mubr.f32.mxu0 0.0
  %731 = vmatmul.mubr.f32.gmra.mrb[0].mxu0 %v519
  %v732 = vpop.f32.mrb[0].mxu0
  %v733 = vadd.f32 %v437, %v732
  %v734 = vpop.f32.mrb[0].mxu0
  %735 = vmatprep.mubr.f32.mxu0 0.0
  %736 = vmatmul.mubr.f32.gmra.mrb[0].mxu0 %v522
  %v737 = vpop.f32.mrb[0].mxu0
  %v738 = vadd.f32 %v437, %v737
  %v739 = vpop.f32.mrb[0].mxu0
  %740 = vmatprep.mubr.f32.mxu0 0.0
  %741 = vmatmul.mubr.f32.gmra.mrb[0].mxu0 %v525
  %v742 = vpop.f32.mrb[0].mxu0
  %v743 = vadd.f32 %v437, %v742
  %v744 = vpop.f32.mrb[0].mxu0
  %745 = vmatprep.mubr.f32.mxu0 0.0
  %746 = vmatmul.mubr.f32.gmra.mrb[0].mxu0 %v528
  %v747 = vpop.f32.mrb[0].mxu0
  %v748 = vadd.f32 %v437, %v747
  %v749 = vpop.f32.mrb[0].mxu0
  %750 = vmatprep.mubr.f32.mxu0 0.0
  %751 = vmatmul.mubr.f32.gmra.mrb[0].mxu0 %v531
  %v752 = vpop.f32.mrb[0].mxu0
  %v753 = vadd.f32 %v437, %v752
  %v754 = vpop.f32.mrb[0].mxu0
  %755 = vmatprep.mubr.f32.mxu0 0.0
  %756 = vmatmul.mubr.f32.gmra.mrb[0].mxu0 %v534
  %v757 = vpop.f32.mrb[0].mxu0
  %v758 = vadd.f32 %v437, %v757
  %v759 = vpop.f32.mrb[0].mxu0
  %760 = vdwg.mxu0
  %v761 = vmax.f32 %v603, 0.0
  %v762 = vmax.f32 %v608, 0.0
  %v763 = vmax.f32 %v613, 0.0
  %v764 = vmax.f32 %v618, 0.0
  %v765 = vmax.f32 %v623, 0.0
  %v766 = vmax.f32 %v628, 0.0
  %v767 = vmax.f32 %v633, 0.0
  %v768 = vmax.f32 %v638, 0.0
  %v769 = vmax.f32 %v643, 0.0
  %v770 = vmax.f32 %v648, 0.0
  %v771 = vmax.f32 %v653, 0.0
  %v772 = vmax.f32 %v658, 0.0
  %v773 = vmax.f32 %v663, 0.0
  %v774 = vmax.f32 %v668, 0.0
  %v775 = vmax.f32 %v673, 0.0
  %v776 = vmax.f32 %v678, 0.0
  %v777 = vmax.f32 %v683, 0.0
  %v778 = vmax.f32 %v688, 0.0
  %v779 = vmax.f32 %v693, 0.0
  %v780 = vmax.f32 %v698, 0.0
  %v781 = vmax.f32 %v703, 0.0
  %v782 = vmax.f32 %v708, 0.0
  %v783 = vmax.f32 %v713, 0.0
  %v784 = vmax.f32 %v718, 0.0
  %v785 = vmax.f32 %v723, 0.0
  %v786 = vmax.f32 %v728, 0.0
  %v787 = vmax.f32 %v733, 0.0
  %v788 = vmax.f32 %v738, 0.0
  %v789 = vmax.f32 %v743, 0.0
  %v790 = vmax.f32 %v748, 0.0
  %v791 = vmax.f32 %v753, 0.0
  %v792 = vmax.f32 %v758, 0.0
  %v793 = vld [vmem:[%s5] sm:$0xff]
  %v794 = vld [vmem:[%s5 + $0x8] sm:$0xff]
  %v795 = vld [vmem:[%s5 + $0x10] sm:$0xff]
  %v796 = vld [vmem:[%s5 + $0x18] sm:$0xff]
  %v797 = vld [vmem:[%s5 + $0x20] sm:$0xff]
  %v798 = vld [vmem:[%s5 + $0x28] sm:$0xff]
  %v799 = vld [vmem:[%s5 + $0x30] sm:$0xff]
  %v800 = vld [vmem:[%s5 + $0x38] sm:$0xff]
  %v801 = vld [vmem:[%s6] sm:$0x1]
  %v803 = vlaneseq
  %v804 = vshrl.u32 %v803, 7
  %v805 = vsub.s32 0, %v804
  %v806 = vrot.slane %v801, %v805
  %v809 = vsel %vm439, %v761, 0
  %v812 = vsel %vm439, %v762, 0
  %v815 = vsel %vm439, %v763, 0
  %v818 = vsel %vm439, %v764, 0
  %v821 = vsel %vm439, %v765, 0
  %v824 = vsel %vm439, %v766, 0
  %v827 = vsel %vm439, %v767, 0
  %v830 = vsel %vm439, %v768, 0
  %v833 = vsel %vm439, %v769, 0
  %v836 = vsel %vm439, %v770, 0
  %v839 = vsel %vm439, %v771, 0
  %v842 = vsel %vm439, %v772, 0
  %v845 = vsel %vm439, %v773, 0
  %v848 = vsel %vm439, %v774, 0
  %v851 = vsel %vm439, %v775, 0
  %v854 = vsel %vm439, %v776, 0
  %v857 = vsel %vm439, %v777, 0
  %v860 = vsel %vm439, %v778, 0
  %v863 = vsel %vm439, %v779, 0
  %v866 = vsel %vm439, %v780, 0
  %v869 = vsel %vm439, %v781, 0
  %v872 = vsel %vm439, %v782, 0
  %v875 = vsel %vm439, %v783, 0
  %v878 = vsel %vm439, %v784, 0
  %v881 = vsel %vm439, %v785, 0
  %v884 = vsel %vm439, %v786, 0
  %v887 = vsel %vm439, %v787, 0
  %v890 = vsel %vm439, %v788, 0
  %v893 = vsel %vm439, %v789, 0
  %v896 = vsel %vm439, %v790, 0
  %v899 = vsel %vm439, %v791, 0
  %v902 = vsel %vm439, %v792, 0
  %904 = vmatprep.subr.mxu0 0.0
  %905 = vmatpush1.msra.mxu0 %v793
  %906 = vmatprep.subr.mxu0 0.0
  %907 = vmatpush1.msra.mxu0 %v794
  %908 = vmatprep.subr.mxu0 0.0
  %909 = vmatpush1.msra.mxu0 %v795
  %910 = vmatprep.subr.mxu0 0.0
  %911 = vmatpush1.msra.mxu0 %v796
  %912 = vmatprep.subr.mxu0 0.0
  %913 = vmatpush1.msra.mxu0 %v797
  %914 = vmatprep.subr.mxu0 0.0
  %915 = vmatpush1.msra.mxu0 %v798
  %916 = vmatprep.subr.mxu0 0.0
  %917 = vmatpush1.msra.mxu0 %v799
  %918 = vmatprep.subr.mxu0 0.0
  %919 = vmatpush1.msra.mxu0 %v800
  %920 = vmatprep.subr.mxu0 0.0
  %921 = vmatpush1.msra.mxu0 0.0
  %922 = vmatprep.subr.mxu0 0.0
  %923 = vmatpush1.msra.mxu0 0.0
  %924 = vmatprep.subr.mxu0 0.0
  %925 = vmatpush1.msra.mxu0 0.0
  %926 = vmatprep.subr.mxu0 0.0
  %927 = vmatpush1.msra.mxu0 0.0
  %928 = vmatprep.subr.mxu0 0.0
  %929 = vmatpush1.msra.mxu0 0.0
  %930 = vmatprep.subr.mxu0 0.0
  %931 = vmatpush1.msra.mxu0 0.0
  %932 = vmatprep.subr.mxu0 0.0
  %933 = vmatpush1.msra.mxu0 0.0
  %934 = vmatprep.subr.mxu0 0.0
  %935 = vmatpush1.msra.mxu0 0.0
  %936 = vmatprep.subr.mxu0 0.0
  %937 = vmatpush1.msra.mxu0 0.0
  %938 = vmatprep.subr.mxu0 0.0
  %939 = vmatpush1.msra.mxu0 0.0
  %940 = vmatprep.subr.mxu0 0.0
  %941 = vmatpush1.msra.mxu0 0.0
  %942 = vmatprep.subr.mxu0 0.0
  %943 = vmatpush1.msra.mxu0 0.0
  %944 = vmatprep.subr.mxu0 0.0
  %945 = vmatpush1.msra.mxu0 0.0
  %946 = vmatprep.subr.mxu0 0.0
  %947 = vmatpush1.msra.mxu0 0.0
  %948 = vmatprep.subr.mxu0 0.0
  %949 = vmatpush1.msra.mxu0 0.0
  %950 = vmatprep.subr.mxu0 0.0
  %951 = vmatpush1.msra.mxu0 0.0
  %952 = vmatprep.subr.mxu0 0.0
  %953 = vmatpush1.msra.mxu0 0.0
  %954 = vmatprep.subr.mxu0 0.0
  %955 = vmatpush1.msra.mxu0 0.0
  %956 = vmatprep.subr.mxu0 0.0
  %957 = vmatpush1.msra.mxu0 0.0
  %958 = vmatprep.subr.mxu0 0.0
  %959 = vmatpush1.msra.mxu0 0.0
  %960 = vmatprep.subr.mxu0 0.0
  %961 = vmatpush1.msra.mxu0 0.0
  %962 = vmatprep.subr.mxu0 0.0
  %963 = vmatpush1.msra.mxu0 0.0
  %964 = vmatprep.subr.mxu0 0.0
  %965 = vmatpush1.msra.mxu0 0.0
  %966 = vmatprep.subr.mxu0 0.0
  %967 = vmatpush1.msra.mxu0 0.0
  %968 = vmatprep.mubr.f32.mxu0 0.0
  %969 = vmatmul.mubr.f32.gmra.mrb[0].mxu0 %v809
  %v970 = vpop.f32.mrb[0].mxu0
  %v971 = vadd.f32 %v806, %v970
  %v972 = vpop.f32.mrb[0].mxu0
  %973 = vmatprep.mubr.f32.mxu0 0.0
  %974 = vmatmul.mubr.f32.gmra.mrb[0].mxu0 %v812
  %v975 = vpop.f32.mrb[0].mxu0
  %v976 = vadd.f32 %v806, %v975
  %v977 = vpop.f32.mrb[0].mxu0
  %978 = vmatprep.mubr.f32.mxu0 0.0
  %979 = vmatmul.mubr.f32.gmra.mrb[0].mxu0 %v815
  %v980 = vpop.f32.mrb[0].mxu0
  %v981 = vadd.f32 %v806, %v980
  %v982 = vpop.f32.mrb[0].mxu0
  %983 = vmatprep.mubr.f32.mxu0 0.0
  %984 = vmatmul.mubr.f32.gmra.mrb[0].mxu0 %v818
  %v985 = vpop.f32.mrb[0].mxu0
  %v986 = vadd.f32 %v806, %v985
  %v987 = vpop.f32.mrb[0].mxu0
  %988 = vmatprep.mubr.f32.mxu0 0.0
  %989 = vmatmul.mubr.f32.gmra.mrb[0].mxu0 %v821
  %v990 = vpop.f32.mrb[0].mxu0
  %v991 = vadd.f32 %v806, %v990
  %v992 = vpop.f32.mrb[0].mxu0
  %993 = vmatprep.mubr.f32.mxu0 0.0
  %994 = vmatmul.mubr.f32.gmra.mrb[0].mxu0 %v824
  %v995 = vpop.f32.mrb[0].mxu0
  %v996 = vadd.f32 %v806, %v995
  %v997 = vpop.f32.mrb[0].mxu0
  %998 = vmatprep.mubr.f32.mxu0 0.0
  %999 = vmatmul.mubr.f32.gmra.mrb[0].mxu0 %v827
  %v1000 = vpop.f32.mrb[0].mxu0
  %v1001 = vadd.f32 %v806, %v1000
  %v1002 = vpop.f32.mrb[0].mxu0
  %1003 = vmatprep.mubr.f32.mxu0 0.0
  %1004 = vmatmul.mubr.f32.gmra.mrb[0].mxu0 %v830
  %v1005 = vpop.f32.mrb[0].mxu0
  %v1006 = vadd.f32 %v806, %v1005
  %v1007 = vpop.f32.mrb[0].mxu0
  %1008 = vmatprep.mubr.f32.mxu0 0.0
  %1009 = vmatmul.mubr.f32.gmra.mrb[0].mxu0 %v833
  %v1010 = vpop.f32.mrb[0].mxu0
  %v1011 = vadd.f32 %v806, %v1010
  %v1012 = vpop.f32.mrb[0].mxu0
  %1013 = vmatprep.mubr.f32.mxu0 0.0
  %1014 = vmatmul.mubr.f32.gmra.mrb[0].mxu0 %v836
  %v1015 = vpop.f32.mrb[0].mxu0
  %v1016 = vadd.f32 %v806, %v1015
  %v1017 = vpop.f32.mrb[0].mxu0
  %1018 = vmatprep.mubr.f32.mxu0 0.0
  %1019 = vmatmul.mubr.f32.gmra.mrb[0].mxu0 %v839
  %v1020 = vpop.f32.mrb[0].mxu0
  %v1021 = vadd.f32 %v806, %v1020
  %v1022 = vpop.f32.mrb[0].mxu0
  %1023 = vmatprep.mubr.f32.mxu0 0.0
  %1024 = vmatmul.mubr.f32.gmra.mrb[0].mxu0 %v842
  %v1025 = vpop.f32.mrb[0].mxu0
  %v1026 = vadd.f32 %v806, %v1025
  %v1027 = vpop.f32.mrb[0].mxu0
  %1028 = vmatprep.mubr.f32.mxu0 0.0
  %1029 = vmatmul.mubr.f32.gmra.mrb[0].mxu0 %v845
  %v1030 = vpop.f32.mrb[0].mxu0
  %v1031 = vadd.f32 %v806, %v1030
  %v1032 = vpop.f32.mrb[0].mxu0
  %1033 = vmatprep.mubr.f32.mxu0 0.0
  %1034 = vmatmul.mubr.f32.gmra.mrb[0].mxu0 %v848
  %v1035 = vpop.f32.mrb[0].mxu0
  %v1036 = vadd.f32 %v806, %v1035
  %v1037 = vpop.f32.mrb[0].mxu0
  %1038 = vmatprep.mubr.f32.mxu0 0.0
  %1039 = vmatmul.mubr.f32.gmra.mrb[0].mxu0 %v851
  %v1040 = vpop.f32.mrb[0].mxu0
  %v1041 = vadd.f32 %v806, %v1040
  %v1042 = vpop.f32.mrb[0].mxu0
  %1043 = vmatprep.mubr.f32.mxu0 0.0
  %1044 = vmatmul.mubr.f32.gmra.mrb[0].mxu0 %v854
  %v1045 = vpop.f32.mrb[0].mxu0
  %v1046 = vadd.f32 %v806, %v1045
  %v1047 = vpop.f32.mrb[0].mxu0
  %1048 = vmatprep.mubr.f32.mxu0 0.0
  %1049 = vmatmul.mubr.f32.gmra.mrb[0].mxu0 %v857
  %v1050 = vpop.f32.mrb[0].mxu0
  %v1051 = vadd.f32 %v806, %v1050
  %v1052 = vpop.f32.mrb[0].mxu0
  %1053 = vmatprep.mubr.f32.mxu0 0.0
  %1054 = vmatmul.mubr.f32.gmra.mrb[0].mxu0 %v860
  %v1055 = vpop.f32.mrb[0].mxu0
  %v1056 = vadd.f32 %v806, %v1055
  %v1057 = vpop.f32.mrb[0].mxu0
  %1058 = vmatprep.mubr.f32.mxu0 0.0
  %1059 = vmatmul.mubr.f32.gmra.mrb[0].mxu0 %v863
  %v1060 = vpop.f32.mrb[0].mxu0
  %v1061 = vadd.f32 %v806, %v1060
  %v1062 = vpop.f32.mrb[0].mxu0
  %1063 = vmatprep.mubr.f32.mxu0 0.0
  %1064 = vmatmul.mubr.f32.gmra.mrb[0].mxu0 %v866
  %v1065 = vpop.f32.mrb[0].mxu0
  %v1066 = vadd.f32 %v806, %v1065
  %v1067 = vpop.f32.mrb[0].mxu0
  %1068 = vmatprep.mubr.f32.mxu0 0.0
  %1069 = vmatmul.mubr.f32.gmra.mrb[0].mxu0 %v869
  %v1070 = vpop.f32.mrb[0].mxu0
  %v1071 = vadd.f32 %v806, %v1070
  %v1072 = vpop.f32.mrb[0].mxu0
  %1073 = vmatprep.mubr.f32.mxu0 0.0
  %1074 = vmatmul.mubr.f32.gmra.mrb[0].mxu0 %v872
  %v1075 = vpop.f32.mrb[0].mxu0
  %v1076 = vadd.f32 %v806, %v1075
  %v1077 = vpop.f32.mrb[0].mxu0
  %1078 = vmatprep.mubr.f32.mxu0 0.0
  %1079 = vmatmul.mubr.f32.gmra.mrb[0].mxu0 %v875
  %v1080 = vpop.f32.mrb[0].mxu0
  %v1081 = vadd.f32 %v806, %v1080
  %v1082 = vpop.f32.mrb[0].mxu0
  %1083 = vmatprep.mubr.f32.mxu0 0.0
  %1084 = vmatmul.mubr.f32.gmra.mrb[0].mxu0 %v878
  %v1085 = vpop.f32.mrb[0].mxu0
  %v1086 = vadd.f32 %v806, %v1085
  %v1087 = vpop.f32.mrb[0].mxu0
  %1088 = vmatprep.mubr.f32.mxu0 0.0
  %1089 = vmatmul.mubr.f32.gmra.mrb[0].mxu0 %v881
  %v1090 = vpop.f32.mrb[0].mxu0
  %v1091 = vadd.f32 %v806, %v1090
  %v1092 = vpop.f32.mrb[0].mxu0
  %1093 = vmatprep.mubr.f32.mxu0 0.0
  %1094 = vmatmul.mubr.f32.gmra.mrb[0].mxu0 %v884
  %v1095 = vpop.f32.mrb[0].mxu0
  %v1096 = vadd.f32 %v806, %v1095
  %v1097 = vpop.f32.mrb[0].mxu0
  %1098 = vmatprep.mubr.f32.mxu0 0.0
  %1099 = vmatmul.mubr.f32.gmra.mrb[0].mxu0 %v887
  %v1100 = vpop.f32.mrb[0].mxu0
  %v1101 = vadd.f32 %v806, %v1100
  %v1102 = vpop.f32.mrb[0].mxu0
  %1103 = vmatprep.mubr.f32.mxu0 0.0
  %1104 = vmatmul.mubr.f32.gmra.mrb[0].mxu0 %v890
  %v1105 = vpop.f32.mrb[0].mxu0
  %v1106 = vadd.f32 %v806, %v1105
  %v1107 = vpop.f32.mrb[0].mxu0
  %1108 = vmatprep.mubr.f32.mxu0 0.0
  %1109 = vmatmul.mubr.f32.gmra.mrb[0].mxu0 %v893
  %v1110 = vpop.f32.mrb[0].mxu0
  %v1111 = vadd.f32 %v806, %v1110
  %v1112 = vpop.f32.mrb[0].mxu0
  %1113 = vmatprep.mubr.f32.mxu0 0.0
  %1114 = vmatmul.mubr.f32.gmra.mrb[0].mxu0 %v896
  %v1115 = vpop.f32.mrb[0].mxu0
  %v1116 = vadd.f32 %v806, %v1115
  %v1117 = vpop.f32.mrb[0].mxu0
  %1118 = vmatprep.mubr.f32.mxu0 0.0
  %1119 = vmatmul.mubr.f32.gmra.mrb[0].mxu0 %v899
  %v1120 = vpop.f32.mrb[0].mxu0
  %v1121 = vadd.f32 %v806, %v1120
  %v1122 = vpop.f32.mrb[0].mxu0
  %1123 = vmatprep.mubr.f32.mxu0 0.0
  %1124 = vmatmul.mubr.f32.gmra.mrb[0].mxu0 %v902
  %v1125 = vpop.f32.mrb[0].mxu0
  %v1126 = vadd.f32 %v806, %v1125
  %v1127 = vpop.f32.mrb[0].mxu0
  %1128 = vdwg.mxu0
  %vm1129 = vcmask 15360
  %1130 = vst.msk [vmem:[%s7] sm:$0xff] %vm1129, %v971
  %1131 = vst.msk [vmem:[%s7 + $0x8] sm:$0xff] %vm1129, %v976
  %1132 = vst.msk [vmem:[%s7 + $0x10] sm:$0xff] %vm1129, %v981
  %1133 = vst.msk [vmem:[%s7 + $0x18] sm:$0xff] %vm1129, %v986
  %1134 = vst.msk [vmem:[%s7 + $0x20] sm:$0xff] %vm1129, %v991
  %1135 = vst.msk [vmem:[%s7 + $0x28] sm:$0xff] %vm1129, %v996
  %1136 = vst.msk [vmem:[%s7 + $0x30] sm:$0xff] %vm1129, %v1001
  %1137 = vst.msk [vmem:[%s7 + $0x38] sm:$0xff] %vm1129, %v1006
  %1138 = vst.msk [vmem:[%s7 + $0x40] sm:$0xff] %vm1129, %v1011
  %1139 = vst.msk [vmem:[%s7 + $0x48] sm:$0xff] %vm1129, %v1016
  %1140 = vst.msk [vmem:[%s7 + $0x50] sm:$0xff] %vm1129, %v1021
  %1141 = vst.msk [vmem:[%s7 + $0x58] sm:$0xff] %vm1129, %v1026
  %1142 = vst.msk [vmem:[%s7 + $0x60] sm:$0xff] %vm1129, %v1031
  %1143 = vst.msk [vmem:[%s7 + $0x68] sm:$0xff] %vm1129, %v1036
  %1144 = vst.msk [vmem:[%s7 + $0x70] sm:$0xff] %vm1129, %v1041
  %1145 = vst.msk [vmem:[%s7 + $0x78] sm:$0xff] %vm1129, %v1046
  %1146 = vst.msk [vmem:[%s7 + $0x80] sm:$0xff] %vm1129, %v1051
  %1147 = vst.msk [vmem:[%s7 + $0x88] sm:$0xff] %vm1129, %v1056
  %1148 = vst.msk [vmem:[%s7 + $0x90] sm:$0xff] %vm1129, %v1061
  %1149 = vst.msk [vmem:[%s7 + $0x98] sm:$0xff] %vm1129, %v1066
  %1150 = vst.msk [vmem:[%s7 + $0xa0] sm:$0xff] %vm1129, %v1071
  %1151 = vst.msk [vmem:[%s7 + $0xa8] sm:$0xff] %vm1129, %v1076
  %1152 = vst.msk [vmem:[%s7 + $0xb0] sm:$0xff] %vm1129, %v1081
  %1153 = vst.msk [vmem:[%s7 + $0xb8] sm:$0xff] %vm1129, %v1086
  %1154 = vst.msk [vmem:[%s7 + $0xc0] sm:$0xff] %vm1129, %v1091
  %1155 = vst.msk [vmem:[%s7 + $0xc8] sm:$0xff] %vm1129, %v1096
  %1156 = vst.msk [vmem:[%s7 + $0xd0] sm:$0xff] %vm1129, %v1101
  %1157 = vst.msk [vmem:[%s7 + $0xd8] sm:$0xff] %vm1129, %v1106
  %1158 = vst.msk [vmem:[%s7 + $0xe0] sm:$0xff] %vm1129, %v1111
  %1159 = vst.msk [vmem:[%s7 + $0xe8] sm:$0xff] %vm1129, %v1116
  %1160 = vst.msk [vmem:[%s7 + $0xf0] sm:$0xff] %vm1129, %v1121
  %1161 = vst.msk [vmem:[%s7 + $0xf8] sm:$0xff] %vm1129, %v1126
  // Predicated region
  $region30: #{critic_forward.1} parent=0 // pred_check
    _
  $region31: #{critic_forward.1} parent=0 // pred_check_branch
    %1163 = sbr.rel (0) target = $region33
  $region32: #{critic_forward.1} parent=0 // pred_region
    _
  $region33: #{critic_forward.1} parent=0 // pred_fallthru
    _
  // Predicated region
  $region34: #{critic_forward.1} parent=0 // pred_check
    _
  $region35: #{critic_forward.1} parent=0 // pred_check_branch
    %1165 = sbr.rel (0) target = $region37
  $region36: #{critic_forward.1} parent=0 // pred_region
    _
  $region37: #{critic_forward.1} parent=0 // pred_fallthru
    _

</llo_original>
